<compile_context>
chip_gen: v6e
topology: v6e:2x2x1
jax: 0.10.0
libtpu: 0.0.40
codegen_flags: <defaults>
</compile_context>

<pallas_src>
import jax
import jax.numpy as jnp
from jax.experimental import pallas as pl
from jax.experimental.pallas import tpu as pltpu


def _cb_encoder_kernel(w_ref, b_ref, x_ref, o_ref):
    # w_ref: (C_out, C_in)      -- resident across the whole grid
    # b_ref: (C_out, 1)         -- resident across the whole grid
    # x_ref: (B*C_in, L_tile)   -- current length tile (batch folded in sublanes)
    # o_ref: (B*C_out, L_tile)
    c_out, c_in = w_ref.shape
    batch = x_ref.shape[0] // c_in

    w = w_ref[...].astype(jnp.float32)
    b = b_ref[...].astype(jnp.float32)
    x = x_ref[...].astype(jnp.float32)

    for bi in range(batch):                       # B is small & static -> unroll
        x_b = x[bi * c_in:(bi + 1) * c_in, :]     # (C_in, L_tile), static slice
        if c_in <= 8:
            # Tiny K: VPU broadcast-FMA; bias folded into the accumulator init
            # so there is no extra bias-add pass over the (C_out, L_tile) tile.
            acc = b + w[:, 0:1] * x_b[0:1, :]
            for i in range(1, c_in):
                acc = acc + w[:, i:i + 1] * x_b[i:i + 1, :]
        else:
            # Larger channel counts: let the MXU do the contraction.
            acc = jnp.dot(w, x_b, preferred_element_type=jnp.float32) + b
        o_ref[bi * c_out:(bi + 1) * c_out, :] = acc.astype(o_ref.dtype)


def _vmem_limits():
    """(vmem_limit_bytes, io_budget_bytes), tuned per TPU generation."""
    phys = 64 * 1024 * 1024  # conservative fallback (v7x-sized) if query fails
    try:  # trace-time hardware query
        phys = int(pltpu.get_tpu_info().vmem_capacity_bytes)
    except Exception:
        pass
    if phys >= 128 * 1024 * 1024:           # v5e / v6e: 128 MiB physical VMEM
        vmem_limit = 64 * 1024 * 1024
    else:                                    # v7x: 64 MiB physical per core
        vmem_limit = 32 * 1024 * 1024
    io_budget = int(vmem_limit * 0.6)        # headroom for kernel intermediates
    return vmem_limit, io_budget


def _choose_l_tile(L, B, C_in, C_out, io_budget):
    """Largest L tile (multiple of 128, capped at 32768) whose double-buffered
    input+output tiles plus unrolled-batch intermediates fit the VMEM budget."""
    per_col = 4 * (2 * B * (C_in + C_out)    # double-buffered x + out tiles
                   + 2 * B * C_out + C_in)   # accumulators / broadcast temps
    max_cols = max(io_budget // max(per_col, 1), 128)
    lt = max(128, min(32768, (max_cols // 128) * 128))
    if L <= lt:
        if L >= 4096:
            # Long enough to be worth >= 2 grid steps (keeps both TensorCores
            # of a v7x chip busy); relative padding waste stays below ~6%.
            lt = ((-(-L // 2)) + 127) // 128 * 128
        else:
            lt = L                            # single full-length block (legal)
    return lt


def cb_encoder_forward(x_ncl, weight, bias, *, l_tile=None, out_dtype=None):
    """Forward pass of CB_Encoder (Conv1d, kernel_size=1).

    Args:
      x_ncl:  (B, C_in, L)      PyTorch Conv1d NCL input layout.
      weight: (C_out, C_in, 1)  PyTorch Conv1d weight.
      bias:   (C_out,)
      out_dtype: optional output dtype (e.g. jnp.bfloat16 nearly halves the
        dominant store traffic); defaults to x_ncl.dtype to match PyTorch.
    Returns:
      (B, C_out, L), matching PyTorch Conv1d(kernel_size=1) output.
    """
    B, C_in, L = x_ncl.shape
    C_out = weight.shape[0]
    out_dtype = x_ncl.dtype if out_dtype is None else out_dtype

    w_mat = weight[:, :, 0]                  # (C_out, C_in)
    b_col = bias.reshape(C_out, 1)           # (C_out, 1)

    vmem_limit, io_budget = _vmem_limits()
    lt = _choose_l_tile(L, B, C_in, C_out, io_budget) if l_tile is None else l_tile
    num_l = -(-L // lt)
    L_pad = num_l * lt

    # Merge batch into the sublane axis: a free, contiguous reshape.
    x2d = x_ncl.reshape(B * C_in, L)
    if L_pad != L:
        # Padded columns only carry bias; they are sliced off below.
        x2d = jnp.pad(x2d, ((0, 0), (0, L_pad - L)))

    out2d = pl.pallas_call(
        _cb_encoder_kernel,
        out_shape=jax.ShapeDtypeStruct((B * C_out, L_pad), out_dtype),
        grid=(num_l,),
        in_specs=[
            # Weight / bias: same block every step -> stay VMEM-resident.
            pl.BlockSpec((C_out, C_in), lambda l: (0, 0)),
            pl.BlockSpec((C_out, 1), lambda l: (0, 0)),
            # x: one (B*C_in, L_tile) slab per length-tile grid point.
            pl.BlockSpec((B * C_in, lt), lambda l: (0, l)),
        ],
        out_specs=pl.BlockSpec((B * C_out, lt), lambda l: (0, l)),
        compiler_params=pltpu.CompilerParams(
            dimension_semantics=("parallel",),
            vmem_limit_bytes=vmem_limit,
        ),
        cost_estimate=pl.CostEstimate(
            flops=2 * B * L_pad * C_in * C_out,
            transcendentals=0,
            bytes_accessed=(x2d.size * x2d.dtype.itemsize
                            + B * C_out * L_pad * jnp.dtype(out_dtype).itemsize
                            + w_mat.size * w_mat.dtype.itemsize
                            + b_col.size * b_col.dtype.itemsize),
        ),
    )(w_mat, b_col, x2d)

    out = out2d.reshape(B, C_out, L_pad)
    if L_pad != L:
        out = out[:, :, :L]
    return out


if __name__ == "__main__":
    key = jax.random.PRNGKey(0)
    kx, kw, kb, kx2 = jax.random.split(key, 4)

    # Small shapes consistent with the module: batch=2, input_size=4,
    # sequence length=16, hidden_size=32.
    B, C_IN, L, HID = 2, 4, 16, 32
    x = jax.random.normal(kx, (B, C_IN, L), dtype=jnp.float32)
    weight = jax.random.normal(kw, (HID, C_IN, 1), dtype=jnp.float32) * 0.1
    bias = jax.random.normal(kb, (HID,), dtype=jnp.float32) * 0.1

    out = jax.block_until_ready(cb_encoder_forward(x, weight, bias))
    ref = jnp.einsum("bil,oi->bol", x, weight[:, :, 0]) + bias[None, :, None]
    assert out.shape == (B, HID, L)
    assert jnp.allclose(out, ref, atol=1e-5, rtol=1e-5)

    # Exercise the multi-tile grid + length-padding path as well.
    L2 = 5000
    x2 = jax.random.normal(kx2, (B, C_IN, L2), dtype=jnp.float32)
    out2 = jax.block_until_ready(cb_encoder_forward(x2, weight, bias))
    ref2 = jnp.einsum("bil,oi->bol", x2, weight[:, :, 0]) + bias[None, :, None]
    assert out2.shape == (B, HID, L2)
    assert jnp.allclose(out2, ref2, atol=1e-5, rtol=1e-5)

    print("KERNEL_OK")
</pallas_src>

<mosaic_0001>
module attributes {stable_mosaic.version = 11 : i64} {
  func.func @_cb_encoder_kernel(%arg0: i32, %arg1: memref<32x4xf32, #tpu.memory_space<vmem>>, %arg2: memref<32x1xf32, #tpu.memory_space<vmem>>, %arg3: memref<8x16xf32, #tpu.memory_space<vmem>>, %arg4: memref<64x16xf32, #tpu.memory_space<vmem>>) attributes {dimension_semantics = [#tpu.dimension_semantics<parallel>], iteration_bounds = array<i64: 1>, scalar_prefetch = 0 : i64, scratch_operands = 0 : i64, tpu.core_type = #tpu.core_type<tc>, window_params = [{pipeline_mode = #tpu.pipeline_mode<synchronous>, transform_indices = @transform_0, window_bounds = array<i64: 32, 4>}, {pipeline_mode = #tpu.pipeline_mode<synchronous>, transform_indices = @transform_1, window_bounds = array<i64: 32, 1>}, {transform_indices = @transform_2, window_bounds = array<i64: 8, 16>}, {transform_indices = @transform_3, window_bounds = array<i64: 64, 16>}]} {
    %c0 = arith.constant 0 : index
    %c0_0 = arith.constant 0 : index
    %0 = vector.load %arg1[%c0, %c0_0] : memref<32x4xf32, #tpu.memory_space<vmem>>, vector<32x4xf32>
    %c0_1 = arith.constant 0 : index
    %c0_2 = arith.constant 0 : index
    %1 = vector.load %arg2[%c0_1, %c0_2] : memref<32x1xf32, #tpu.memory_space<vmem>>, vector<32x1xf32>
    %c0_3 = arith.constant 0 : index
    %c0_4 = arith.constant 0 : index
    %2 = vector.load %arg3[%c0_3, %c0_4] : memref<8x16xf32, #tpu.memory_space<vmem>>, vector<8x16xf32>
    %3 = vector.extract_strided_slice %2 {offsets = [0, 0], sizes = [4, 16], strides = [1, 1]} : vector<8x16xf32> to vector<4x16xf32>
    %4 = vector.extract_strided_slice %0 {offsets = [0, 0], sizes = [32, 1], strides = [1, 1]} : vector<32x4xf32> to vector<32x1xf32>
    %5 = vector.extract_strided_slice %3 {offsets = [0, 0], sizes = [1, 16], strides = [1, 1]} : vector<4x16xf32> to vector<1x16xf32>
    %6 = vector.broadcast %4 : vector<32x1xf32> to vector<32x16xf32>
    %7 = vector.broadcast %5 : vector<1x16xf32> to vector<32x16xf32>
    %8 = arith.mulf %6, %7 : vector<32x16xf32>
    %9 = vector.broadcast %1 : vector<32x1xf32> to vector<32x16xf32>
    %10 = arith.addf %9, %8 : vector<32x16xf32>
    %11 = vector.extract_strided_slice %0 {offsets = [0, 1], sizes = [32, 1], strides = [1, 1]} : vector<32x4xf32> to vector<32x1xf32>
    %12 = vector.extract_strided_slice %3 {offsets = [1, 0], sizes = [1, 16], strides = [1, 1]} : vector<4x16xf32> to vector<1x16xf32>
    %13 = vector.broadcast %11 : vector<32x1xf32> to vector<32x16xf32>
    %14 = vector.broadcast %12 : vector<1x16xf32> to vector<32x16xf32>
    %15 = arith.mulf %13, %14 : vector<32x16xf32>
    %16 = arith.addf %10, %15 : vector<32x16xf32>
    %17 = vector.extract_strided_slice %0 {offsets = [0, 2], sizes = [32, 1], strides = [1, 1]} : vector<32x4xf32> to vector<32x1xf32>
    %18 = vector.extract_strided_slice %3 {offsets = [2, 0], sizes = [1, 16], strides = [1, 1]} : vector<4x16xf32> to vector<1x16xf32>
    %19 = vector.broadcast %17 : vector<32x1xf32> to vector<32x16xf32>
    %20 = vector.broadcast %18 : vector<1x16xf32> to vector<32x16xf32>
    %21 = arith.mulf %19, %20 : vector<32x16xf32>
    %22 = arith.addf %16, %21 : vector<32x16xf32>
    %23 = vector.extract_strided_slice %0 {offsets = [0, 3], sizes = [32, 1], strides = [1, 1]} : vector<32x4xf32> to vector<32x1xf32>
    %24 = vector.extract_strided_slice %3 {offsets = [3, 0], sizes = [1, 16], strides = [1, 1]} : vector<4x16xf32> to vector<1x16xf32>
    %25 = vector.broadcast %23 : vector<32x1xf32> to vector<32x16xf32>
    %26 = vector.broadcast %24 : vector<1x16xf32> to vector<32x16xf32>
    %27 = arith.mulf %25, %26 : vector<32x16xf32>
    %28 = arith.addf %22, %27 : vector<32x16xf32>
    %c0_5 = arith.constant 0 : index
    %c0_6 = arith.constant 0 : index
    %29 = vector.load %arg4[%c0_5, %c0_6] : memref<64x16xf32, #tpu.memory_space<vmem>>, vector<32x16xf32>
    tpu.vector_store %arg4[%c0_5, %c0_6], %28 {strides = array<i32>} : memref<64x16xf32, #tpu.memory_space<vmem>>, vector<32x16xf32>,
    %30 = vector.extract_strided_slice %2 {offsets = [4, 0], sizes = [4, 16], strides = [1, 1]} : vector<8x16xf32> to vector<4x16xf32>
    %31 = vector.extract_strided_slice %0 {offsets = [0, 0], sizes = [32, 1], strides = [1, 1]} : vector<32x4xf32> to vector<32x1xf32>
    %32 = vector.extract_strided_slice %30 {offsets = [0, 0], sizes = [1, 16], strides = [1, 1]} : vector<4x16xf32> to vector<1x16xf32>
    %33 = vector.broadcast %31 : vector<32x1xf32> to vector<32x16xf32>
    %34 = vector.broadcast %32 : vector<1x16xf32> to vector<32x16xf32>
    %35 = arith.mulf %33, %34 : vector<32x16xf32>
    %36 = vector.broadcast %1 : vector<32x1xf32> to vector<32x16xf32>
    %37 = arith.addf %36, %35 : vector<32x16xf32>
    %38 = vector.extract_strided_slice %0 {offsets = [0, 1], sizes = [32, 1], strides = [1, 1]} : vector<32x4xf32> to vector<32x1xf32>
    %39 = vector.extract_strided_slice %30 {offsets = [1, 0], sizes = [1, 16], strides = [1, 1]} : vector<4x16xf32> to vector<1x16xf32>
    %40 = vector.broadcast %38 : vector<32x1xf32> to vector<32x16xf32>
    %41 = vector.broadcast %39 : vector<1x16xf32> to vector<32x16xf32>
    %42 = arith.mulf %40, %41 : vector<32x16xf32>
    %43 = arith.addf %37, %42 : vector<32x16xf32>
    %44 = vector.extract_strided_slice %0 {offsets = [0, 2], sizes = [32, 1], strides = [1, 1]} : vector<32x4xf32> to vector<32x1xf32>
    %45 = vector.extract_strided_slice %30 {offsets = [2, 0], sizes = [1, 16], strides = [1, 1]} : vector<4x16xf32> to vector<1x16xf32>
    %46 = vector.broadcast %44 : vector<32x1xf32> to vector<32x16xf32>
    %47 = vector.broadcast %45 : vector<1x16xf32> to vector<32x16xf32>
    %48 = arith.mulf %46, %47 : vector<32x16xf32>
    %49 = arith.addf %43, %48 : vector<32x16xf32>
    %50 = vector.extract_strided_slice %0 {offsets = [0, 3], sizes = [32, 1], strides = [1, 1]} : vector<32x4xf32> to vector<32x1xf32>
    %51 = vector.extract_strided_slice %30 {offsets = [3, 0], sizes = [1, 16], strides = [1, 1]} : vector<4x16xf32> to vector<1x16xf32>
    %52 = vector.broadcast %50 : vector<32x1xf32> to vector<32x16xf32>
    %53 = vector.broadcast %51 : vector<1x16xf32> to vector<32x16xf32>
    %54 = arith.mulf %52, %53 : vector<32x16xf32>
    %55 = arith.addf %49, %54 : vector<32x16xf32>
    %c32 = arith.constant 32 : index
    %c0_7 = arith.constant 0 : index
    %56 = vector.load %arg4[%c32, %c0_7] : memref<64x16xf32, #tpu.memory_space<vmem>>, vector<32x16xf32>
    tpu.vector_store %arg4[%c32, %c0_7], %55 {strides = array<i32>} : memref<64x16xf32, #tpu.memory_space<vmem>>, vector<32x16xf32>,
    return
  }
  func.func @transform_0(%arg0: i32) -> (i32, i32) {
    %c0_i32 = arith.constant 0 : i32
    %c0_i32_0 = arith.constant 0 : i32
    %c0_i32_1 = arith.constant 0 : i32
    return %c0_i32, %c0_i32_0 : i32, i32
  }
  func.func @transform_1(%arg0: i32) -> (i32, i32) {
    %c0_i32 = arith.constant 0 : i32
    %c0_i32_0 = arith.constant 0 : i32
    %c0_i32_1 = arith.constant 0 : i32
    return %c0_i32, %c0_i32_0 : i32, i32
  }
  func.func @transform_2(%arg0: i32) -> (i32, i32) {
    %c0_i32 = arith.constant 0 : i32
    %c0_i32_0 = arith.constant 0 : i32
    return %c0_i32, %arg0 : i32, i32
  }
  func.func @transform_3(%arg0: i32) -> (i32, i32) {
    %c0_i32 = arith.constant 0 : i32
    %c0_i32_0 = arith.constant 0 : i32
    return %c0_i32, %arg0 : i32, i32
  }
}

</mosaic_0001>

<llo_original>
// kernel: tpu_custom_call.1
$region0: #{tpu_custom_call.1}
  #allocation0 [shape = 'u32[]', space=smem, size = 0x4, offset = 0x4, fixed_abs, tag = 'smem constant byte address 0x4 - core index']
  #allocation1 [shape = 'u32[144,128]{1,0:T(1,128)}', space=vmem, size = 0x12000, scoped, tag = 'internal scratch']
  %s0 = inlined_call_operand.vmem [shape: f32[32,4], index: 0, kind: input, shape index: {}]
  %s1 = inlined_call_operand.vmem [shape: f32[32,1], index: 1, kind: input, shape index: {}]
  %s2 = inlined_call_operand.vmem [shape: f32[8,16], index: 2, kind: input, shape index: {}]
  %s3 = inlined_call_operand.vmem [shape: f32[64,16], index: 3, kind: output, shape index: {}]
  %s4 = sld [smem:[#allocation0]]
  $region22: #{tpu_custom_call.1} parent=0
    _
  %s6 = ssub.s32 1, %s4
  %s7 = scalar_select 0, %s6, %s4
  // Predicated region
  $region2: #{tpu_custom_call.1} parent=0 // pred_check
    _
  $region3: #{tpu_custom_call.1} parent=0 // pred_check_branch
    %9 = sbr.rel (0) target = $region5
  $region4: #{tpu_custom_call.1} parent=0 // pred_region
    _
  $region5: #{tpu_custom_call.1} parent=0 // pred_fallthru
    _
  // Predicated region
  $region6: #{tpu_custom_call.1} parent=0 // pred_check
    _
  $region7: #{tpu_custom_call.1} parent=0 // pred_check_branch
    %11 = sbr.rel (0) target = $region9
  $region8: #{tpu_custom_call.1} parent=0 // pred_region
    _
  $region9: #{tpu_custom_call.1} parent=0 // pred_fallthru
    _
  // Predicated region
  $region10: #{tpu_custom_call.1} parent=0 // pred_check
    _
  $region11: #{tpu_custom_call.1} parent=0 // pred_check_branch
    %13 = sbr.rel (0) target = $region13
  $region12: #{tpu_custom_call.1} parent=0 // pred_region
    _
  $region13: #{tpu_custom_call.1} parent=0 // pred_fallthru
    _
  %v14 = vld [vmem:[%s0] sm:$0xff]
  %v15 = vld [vmem:[%s0 + $0x8] sm:$0xff]
  %v16 = vld [vmem:[%s0 + $0x10] sm:$0xff]
  %v17 = vld [vmem:[%s0 + $0x18] sm:$0xff]
  %v18 = vld [vmem:[%s1] sm:$0xff]
  %v19 = vld [vmem:[%s1 + $0x8] sm:$0xff]
  %v20 = vld [vmem:[%s1 + $0x10] sm:$0xff]
  %v21 = vld [vmem:[%s1 + $0x18] sm:$0xff]
  %v22 = vld [vmem:[%s2] sm:$0xff]
  %24 = vset.pattern.permute.xlu0 0
  %25 = vperm.xlu0 %24, %v14
  %v26 = vpop.permute.xlu0 %25
  %29 = vset.pattern.permute.xlu0 0
  %30 = vperm.xlu0 %29, %v15
  %v31 = vpop.permute.xlu0 %30
  %34 = vset.pattern.permute.xlu0 0
  %35 = vperm.xlu0 %34, %v16
  %v36 = vpop.permute.xlu0 %35
  %39 = vset.pattern.permute.xlu0 0
  %40 = vperm.xlu0 %39, %v17
  %v41 = vpop.permute.xlu0 %40
  %v43 = vlaneseq
  %v44 = vshrl.u32 %v43, 7
  %v45 = vsub.s32 0, %v44
  %v46 = vrot.slane %v22, %v45
  %v47 = vmul.f32 %v26, %v46
  %v48 = vmul.f32 %v31, %v46
  %v49 = vmul.f32 %v36, %v46
  %v50 = vmul.f32 %v41, %v46
  %52 = vset.pattern.permute.xlu0 0
  %53 = vperm.xlu0 %52, %v18
  %v54 = vpop.permute.xlu0 %53
  %57 = vset.pattern.permute.xlu0 0
  %58 = vperm.xlu0 %57, %v19
  %v59 = vpop.permute.xlu0 %58
  %62 = vset.pattern.permute.xlu0 0
  %63 = vperm.xlu0 %62, %v20
  %v64 = vpop.permute.xlu0 %63
  %67 = vset.pattern.permute.xlu0 0
  %68 = vperm.xlu0 %67, %v21
  %v69 = vpop.permute.xlu0 %68
  %v71 = vadd.f32 %v54, %v47
  %v72 = vadd.f32 %v59, %v48
  %v73 = vadd.f32 %v64, %v49
  %v74 = vadd.f32 %v69, %v50
  %75 = vset.pattern.permute.xlu0 1
  %76 = vperm.xlu0 %75, %v14
  %v77 = vpop.permute.xlu0 %76
  %79 = vset.pattern.permute.xlu0 1
  %80 = vperm.xlu0 %79, %v15
  %v81 = vpop.permute.xlu0 %80
  %83 = vset.pattern.permute.xlu0 1
  %84 = vperm.xlu0 %83, %v16
  %v85 = vpop.permute.xlu0 %84
  %87 = vset.pattern.permute.xlu0 1
  %88 = vperm.xlu0 %87, %v17
  %v89 = vpop.permute.xlu0 %88
  %v91 = vlaneseq
  %v92 = vshrl.u32 %v91, 7
  %v93 = vsub.s32 1, %v92
  %v94 = vrot.slane %v22, %v93
  %v95 = vmul.f32 %v77, %v94
  %v96 = vmul.f32 %v81, %v94
  %v97 = vmul.f32 %v85, %v94
  %v98 = vmul.f32 %v89, %v94
  %v99 = vadd.f32 %v71, %v95
  %v100 = vadd.f32 %v72, %v96
  %v101 = vadd.f32 %v73, %v97
  %v102 = vadd.f32 %v74, %v98
  %103 = vset.pattern.permute.xlu0 2
  %104 = vperm.xlu0 %103, %v14
  %v105 = vpop.permute.xlu0 %104
  %107 = vset.pattern.permute.xlu0 2
  %108 = vperm.xlu0 %107, %v15
  %v109 = vpop.permute.xlu0 %108
  %111 = vset.pattern.permute.xlu0 2
  %112 = vperm.xlu0 %111, %v16
  %v113 = vpop.permute.xlu0 %112
  %115 = vset.pattern.permute.xlu0 2
  %116 = vperm.xlu0 %115, %v17
  %v117 = vpop.permute.xlu0 %116
  %v119 = vlaneseq
  %v120 = vshrl.u32 %v119, 7
  %v121 = vsub.s32 2, %v120
  %v122 = vrot.slane %v22, %v121
  %v123 = vmul.f32 %v105, %v122
  %v124 = vmul.f32 %v109, %v122
  %v125 = vmul.f32 %v113, %v122
  %v126 = vmul.f32 %v117, %v122
  %v127 = vadd.f32 %v99, %v123
  %v128 = vadd.f32 %v100, %v124
  %v129 = vadd.f32 %v101, %v125
  %v130 = vadd.f32 %v102, %v126
  %131 = vset.pattern.permute.xlu0 3
  %132 = vperm.xlu0 %131, %v14
  %v133 = vpop.permute.xlu0 %132
  %135 = vset.pattern.permute.xlu0 3
  %136 = vperm.xlu0 %135, %v15
  %v137 = vpop.permute.xlu0 %136
  %139 = vset.pattern.permute.xlu0 3
  %140 = vperm.xlu0 %139, %v16
  %v141 = vpop.permute.xlu0 %140
  %143 = vset.pattern.permute.xlu0 3
  %144 = vperm.xlu0 %143, %v17
  %v145 = vpop.permute.xlu0 %144
  %v147 = vlaneseq
  %v148 = vshrl.u32 %v147, 7
  %v149 = vsub.s32 3, %v148
  %v150 = vrot.slane %v22, %v149
  %v151 = vmul.f32 %v133, %v150
  %v152 = vmul.f32 %v137, %v150
  %v153 = vmul.f32 %v141, %v150
  %v154 = vmul.f32 %v145, %v150
  %v155 = vadd.f32 %v127, %v151
  %v156 = vadd.f32 %v128, %v152
  %v157 = vadd.f32 %v129, %v153
  %v158 = vadd.f32 %v130, %v154
  %vm159 = vcmask 130048
  %160 = vst.msk [vmem:[%s3] sm:$0xff] %vm159, %v155
  %161 = vst.msk [vmem:[%s3 + $0x8] sm:$0xff] %vm159, %v156
  %162 = vst.msk [vmem:[%s3 + $0x10] sm:$0xff] %vm159, %v157
  %163 = vst.msk [vmem:[%s3 + $0x18] sm:$0xff] %vm159, %v158
  %v164 = vlaneseq
  %v165 = vshrl.u32 %v164, 7
  %v166 = vsub.s32 4, %v165
  %v167 = vrot.slane %v22, %v166
  %v168 = vmul.f32 %v26, %v167
  %v169 = vmul.f32 %v31, %v167
  %v170 = vmul.f32 %v36, %v167
  %v171 = vmul.f32 %v41, %v167
  %v172 = vadd.f32 %v54, %v168
  %v173 = vadd.f32 %v59, %v169
  %v174 = vadd.f32 %v64, %v170
  %v175 = vadd.f32 %v69, %v171
  %v176 = vlaneseq
  %v177 = vshrl.u32 %v176, 7
  %v178 = vsub.s32 5, %v177
  %v179 = vrot.slane %v22, %v178
  %v180 = vmul.f32 %v77, %v179
  %v181 = vmul.f32 %v81, %v179
  %v182 = vmul.f32 %v85, %v179
  %v183 = vmul.f32 %v89, %v179
  %v184 = vadd.f32 %v172, %v180
  %v185 = vadd.f32 %v173, %v181
  %v186 = vadd.f32 %v174, %v182
  %v187 = vadd.f32 %v175, %v183
  %v188 = vlaneseq
  %v189 = vshrl.u32 %v188, 7
  %v190 = vsub.s32 6, %v189
  %v191 = vrot.slane %v22, %v190
  %v192 = vmul.f32 %v105, %v191
  %v193 = vmul.f32 %v109, %v191
  %v194 = vmul.f32 %v113, %v191
  %v195 = vmul.f32 %v117, %v191
  %v196 = vadd.f32 %v184, %v192
  %v197 = vadd.f32 %v185, %v193
  %v198 = vadd.f32 %v186, %v194
  %v199 = vadd.f32 %v187, %v195
  %v200 = vlaneseq
  %v201 = vshrl.u32 %v200, 7
  %v202 = vsub.s32 7, %v201
  %v203 = vrot.slane %v22, %v202
  %v204 = vmul.f32 %v133, %v203
  %v205 = vmul.f32 %v137, %v203
  %v206 = vmul.f32 %v141, %v203
  %v207 = vmul.f32 %v145, %v203
  %v208 = vadd.f32 %v196, %v204
  %v209 = vadd.f32 %v197, %v205
  %v210 = vadd.f32 %v198, %v206
  %v211 = vadd.f32 %v199, %v207
  %212 = vst.msk [vmem:[%s3 + $0x20] sm:$0xff] %vm159, %v208
  %213 = vst.msk [vmem:[%s3 + $0x28] sm:$0xff] %vm159, %v209
  %214 = vst.msk [vmem:[%s3 + $0x30] sm:$0xff] %vm159, %v210
  %215 = vst.msk [vmem:[%s3 + $0x38] sm:$0xff] %vm159, %v211
  // Predicated region
  $region14: #{tpu_custom_call.1} parent=0 // pred_check
    _
  $region15: #{tpu_custom_call.1} parent=0 // pred_check_branch
    %217 = sbr.rel (0) target = $region17
  $region16: #{tpu_custom_call.1} parent=0 // pred_region
    _
  $region17: #{tpu_custom_call.1} parent=0 // pred_fallthru
    _
  // Predicated region
  $region18: #{tpu_custom_call.1} parent=0 // pred_check
    _
  $region19: #{tpu_custom_call.1} parent=0 // pred_check_branch
    %219 = sbr.rel (0) target = $region21
  $region20: #{tpu_custom_call.1} parent=0 // pred_region
    _
  $region21: #{tpu_custom_call.1} parent=0 // pred_fallthru
    _

</llo_original>
